<compile_context>
chip_gen: v6e
topology: v6e:2x2x1
jax: 0.10.0
libtpu: 0.0.40
codegen_flags: <defaults>
</compile_context>

<pallas_src>
import jax
import jax.numpy as jnp
from jax.experimental import pallas as pl
from jax.experimental.pallas import tpu as pltpu

T_DIM = 150
C_DIM = 150


def _round_up(x, m):
    return (x + m - 1) // m * m


def _ca_net_kernel(x_ref, wmu_ref, wlv_ref, bmu_ref, blv_ref, eps_ref,
                   c_ref, mu_ref, lv_ref):
    # x_ref:   (TM, T_DIM)     row tile of flattened text embeddings (f32/bf16)
    # wmu_ref: (T_DIM, C_DIM)  fc weight, mu half    (f32, resident across grid)
    # wlv_ref: (T_DIM, C_DIM)  fc weight, logvar half
    # bmu_ref: (1, C_DIM)      bias, mu half
    # blv_ref: (1, C_DIM)      bias, logvar half
    # eps_ref: (TM, C_DIM)     standard-normal noise (f32/bf16)
    # outputs: c_code, mu, logvar each (TM, C_DIM) f32
    x = x_ref[...].astype(jnp.float32)
    eps = eps_ref[...].astype(jnp.float32)

    # fc + ReLU as two lane-aligned matmuls (MXU, f32 accumulation).
    # ReLU is applied to both halves (so logvar >= 0), exactly like the
    # PyTorch module (relu happens before the mu/logvar split).
    mu = jnp.dot(x, wmu_ref[...], preferred_element_type=jnp.float32) + bmu_ref[...]
    mu = jnp.maximum(mu, 0.0)
    lv = jnp.dot(x, wlv_ref[...], preferred_element_type=jnp.float32) + blv_ref[...]
    lv = jnp.maximum(lv, 0.0)

    # reparametrize: std = exp(0.5 * logvar); c = eps * std + mu
    std = jnp.exp(0.5 * lv)
    c_ref[...] = (eps * std + mu).astype(c_ref.dtype)
    mu_ref[...] = mu.astype(mu_ref.dtype)
    lv_ref[...] = lv.astype(lv_ref.dtype)


def ca_net_forward(text_embedding, w, b, eps, *, row_tile=2048):
    """CA_NET forward.

    text_embedding: (B, S, T_DIM) f32 or bf16
    w:              (T_DIM, 2*C_DIM) f32   (torch weight transposed: (in, out))
    b:              (2*C_DIM,) f32
    eps:            (B, S, C_DIM) f32 or bf16 standard-normal noise
    Returns (c_code, mu, logvar), each (B, S, C_DIM) f32.

    row_tile: max rows per grid step. 2048 is safe on all generations
    (v7x has 64 MiB VMEM); on v5e/v6e (128 MiB) 4096 is a small further win.
    """
    B, S, T = text_embedding.shape
    assert T == T_DIM
    M = B * S
    x2d = text_embedding.reshape(M, T_DIM)
    eps2d = eps.reshape(M, C_DIM)

    # Lane-aligned weight/bias halves (avoid in-kernel slice at column 150).
    w = w.astype(jnp.float32)
    b = b.astype(jnp.float32)
    w_mu = w[:, :C_DIM]
    w_lv = w[:, C_DIM:]
    b_mu = b[:C_DIM].reshape(1, C_DIM)
    b_lv = b[C_DIM:].reshape(1, C_DIM)

    # Row tile: multiple of 8 sublanes, capped by row_tile, and small enough
    # that the grid has >= 4 steps when M allows (>= 2 per TC on v7x).
    TM = max(8, min(_round_up(row_tile, 8), _round_up(pl.cdiv(M, 4), 8)))
    grid = (pl.cdiv(M, TM),)   # ragged last block: padded reads, masked writes

    out_shapes = (
        jax.ShapeDtypeStruct((M, C_DIM), jnp.float32),  # c_code
        jax.ShapeDtypeStruct((M, C_DIM), jnp.float32),  # mu
        jax.ShapeDtypeStruct((M, C_DIM), jnp.float32),  # logvar
    )

    in_itemsize = jnp.dtype(x2d.dtype).itemsize
    eps_itemsize = jnp.dtype(eps2d.dtype).itemsize
    cost = pl.CostEstimate(
        flops=2 * M * T_DIM * (2 * C_DIM),          # two M x 150 x 150 matmuls
        transcendentals=M * C_DIM,                  # exp
        bytes_accessed=(M * T_DIM * in_itemsize     # x read
                        + M * C_DIM * eps_itemsize  # eps read
                        + 3 * M * C_DIM * 4         # c, mu, logvar written
                        + (w.size + b.size) * 4),   # resident params
    )

    c2d, mu2d, lv2d = pl.pallas_call(
        _ca_net_kernel,
        out_shape=out_shapes,
        grid=grid,
        in_specs=[
            pl.BlockSpec((TM, T_DIM), lambda i: (i, 0)),     # x (tiled over M)
            pl.BlockSpec((T_DIM, C_DIM), lambda i: (0, 0)),  # w_mu (resident)
            pl.BlockSpec((T_DIM, C_DIM), lambda i: (0, 0)),  # w_lv (resident)
            pl.BlockSpec((1, C_DIM), lambda i: (0, 0)),      # b_mu (resident)
            pl.BlockSpec((1, C_DIM), lambda i: (0, 0)),      # b_lv (resident)
            pl.BlockSpec((TM, C_DIM), lambda i: (i, 0)),     # eps (tiled over M)
        ],
        out_specs=(
            pl.BlockSpec((TM, C_DIM), lambda i: (i, 0)),
            pl.BlockSpec((TM, C_DIM), lambda i: (i, 0)),
            pl.BlockSpec((TM, C_DIM), lambda i: (i, 0)),
        ),
        compiler_params=pltpu.CompilerParams(
            dimension_semantics=("parallel",),
            # VMEM accounting (150 lanes pad to 256): x+eps+3 outputs ~5 KiB/row
            # f32, double-buffered ~10 KiB/row -> ~21 MiB at TM=2048, plus
            # ~0.6 MiB resident weights. 48 MiB leaves headroom for compiler
            # scratch and stays under v7x's 64 MiB physical VMEM.
            vmem_limit_bytes=48 * 1024 * 1024,
        ),
        cost_estimate=cost,
    )(x2d, w_mu, w_lv, b_mu, b_lv, eps2d)

    return (
        c2d.reshape(B, S, C_DIM),
        mu2d.reshape(B, S, C_DIM),
        lv2d.reshape(B, S, C_DIM),
    )


def _reference(x, w, b, eps):
    h = jnp.maximum(
        jnp.einsum("bst,to->bso", x.astype(jnp.float32), w) + b, 0.0)
    mu, lv = h[..., :C_DIM], h[..., C_DIM:]
    c = eps.astype(jnp.float32) * jnp.exp(0.5 * lv) + mu
    return c, mu, lv


if __name__ == "__main__":
    key = jax.random.PRNGKey(0)
    k_x, k_w, k_b, k_eps, k_x2, k_eps2 = jax.random.split(key, 6)

    # Synthetic parameters mimicking nn.Linear(150, 300).
    # NOTE: torch stores weight as (out, in); here it is (in, out).
    w = (jax.random.normal(k_w, (T_DIM, 2 * C_DIM), jnp.float32)
         * (1.0 / jnp.sqrt(T_DIM)))
    b = jax.random.normal(k_b, (2 * C_DIM,), jnp.float32) * 0.01

    # --- Test 1: f32, M divisible by the row tile ------------------------
    B, S = 2, 8
    x = jax.random.normal(k_x, (B, S, T_DIM), jnp.float32)
    eps = jax.random.normal(k_eps, (B, S, C_DIM), jnp.float32)

    c_code, mu, logvar = ca_net_forward(x, w, b, eps)
    jax.block_until_ready((c_code, mu, logvar))

    c_ref, mu_ref, lv_ref = _reference(x, w, b, eps)
    assert jnp.allclose(mu, mu_ref, atol=1e-4, rtol=1e-4)
    assert jnp.allclose(logvar, lv_ref, atol=1e-4, rtol=1e-4)
    assert jnp.allclose(c_code, c_ref, atol=1e-4, rtol=1e-4)

    # --- Test 2: bf16 streamed inputs + ragged last block (M % TM != 0) ---
    B2, S2 = 3, 5   # M = 15 -> TM = 8, grid = 2, last block partial/masked
    x2 = jax.random.normal(k_x2, (B2, S2, T_DIM), jnp.float32).astype(jnp.bfloat16)
    eps2 = jax.random.normal(k_eps2, (B2, S2, C_DIM), jnp.float32).astype(jnp.bfloat16)

    c2, mu2, lv2 = ca_net_forward(x2, w, b, eps2)
    jax.block_until_ready((c2, mu2, lv2))

    c2_ref, mu2_ref, lv2_ref = _reference(x2, w, b, eps2)
    assert jnp.allclose(mu2, mu2_ref, atol=1e-4, rtol=1e-4)
    assert jnp.allclose(lv2, lv2_ref, atol=1e-4, rtol=1e-4)
    assert jnp.allclose(c2, c2_ref, atol=1e-4, rtol=1e-4)

    print("KERNEL_OK")
</pallas_src>

<mosaic_0001>
module attributes {stable_mosaic.version = 11 : i64} {
  func.func @_ca_net_kernel(%arg0: i32, %arg1: memref<8x150xf32, #tpu.memory_space<vmem>>, %arg2: memref<150x150xf32, #tpu.memory_space<vmem>>, %arg3: memref<150x150xf32, #tpu.memory_space<vmem>>, %arg4: memref<1x150xf32, #tpu.memory_space<vmem>>, %arg5: memref<1x150xf32, #tpu.memory_space<vmem>>, %arg6: memref<8x150xf32, #tpu.memory_space<vmem>>, %arg7: memref<8x150xf32, #tpu.memory_space<vmem>>, %arg8: memref<8x150xf32, #tpu.memory_space<vmem>>, %arg9: memref<8x150xf32, #tpu.memory_space<vmem>>) attributes {dimension_semantics = [#tpu.dimension_semantics<parallel>], iteration_bounds = array<i64: 2>, scalar_prefetch = 0 : i64, scratch_operands = 0 : i64, tpu.core_type = #tpu.core_type<tc>, window_params = [{transform_indices = @transform_0, window_bounds = array<i64: 8, 150>}, {pipeline_mode = #tpu.pipeline_mode<synchronous>, transform_indices = @transform_1, window_bounds = array<i64: 150, 150>}, {pipeline_mode = #tpu.pipeline_mode<synchronous>, transform_indices = @transform_2, window_bounds = array<i64: 150, 150>}, {pipeline_mode = #tpu.pipeline_mode<synchronous>, transform_indices = @transform_3, window_bounds = array<i64: 1, 150>}, {pipeline_mode = #tpu.pipeline_mode<synchronous>, transform_indices = @transform_4, window_bounds = array<i64: 1, 150>}, {transform_indices = @transform_5, window_bounds = array<i64: 8, 150>}, {transform_indices = @transform_6, window_bounds = array<i64: 8, 150>}, {transform_indices = @transform_7, window_bounds = array<i64: 8, 150>}, {transform_indices = @transform_8, window_bounds = array<i64: 8, 150>}]} {
    %c0 = arith.constant 0 : index
    %c0_0 = arith.constant 0 : index
    %0 = vector.load %arg1[%c0, %c0_0] : memref<8x150xf32, #tpu.memory_space<vmem>>, vector<8x150xf32>
    %c0_1 = arith.constant 0 : index
    %c0_2 = arith.constant 0 : index
    %1 = vector.load %arg6[%c0_1, %c0_2] : memref<8x150xf32, #tpu.memory_space<vmem>>, vector<8x150xf32>
    %c0_3 = arith.constant 0 : index
    %c0_4 = arith.constant 0 : index
    %2 = vector.load %arg2[%c0_3, %c0_4] : memref<150x150xf32, #tpu.memory_space<vmem>>, vector<150x150xf32>
    %cst = arith.constant dense<0.000000e+00> : vector<8x150xf32>
    %3 = tpu.matmul %0, %2, %cst {dimension_numbers = #tpu.dot_dimension_numbers<[1], [0], [0], [1], [0, 0, 1, 1], [], []>} : vector<8x150xf32>, vector<150x150xf32>, vector<8x150xf32> -> vector<8x150xf32>
    %c0_5 = arith.constant 0 : index
    %c0_6 = arith.constant 0 : index
    %4 = vector.load %arg4[%c0_5, %c0_6] : memref<1x150xf32, #tpu.memory_space<vmem>>, vector<1x150xf32>
    %5 = vector.broadcast %4 : vector<1x150xf32> to vector<8x150xf32>
    %6 = arith.addf %3, %5 : vector<8x150xf32>
    %cst_7 = arith.constant 0.000000e+00 : f32
    %7 = vector.broadcast %cst_7 : f32 to vector<8x150xf32>
    %8 = arith.maximumf %6, %7 : vector<8x150xf32>
    %c0_8 = arith.constant 0 : index
    %c0_9 = arith.constant 0 : index
    %9 = vector.load %arg3[%c0_8, %c0_9] : memref<150x150xf32, #tpu.memory_space<vmem>>, vector<150x150xf32>
    %cst_10 = arith.constant dense<0.000000e+00> : vector<8x150xf32>
    %10 = tpu.matmul %0, %9, %cst_10 {dimension_numbers = #tpu.dot_dimension_numbers<[1], [0], [0], [1], [0, 0, 1, 1], [], []>} : vector<8x150xf32>, vector<150x150xf32>, vector<8x150xf32> -> vector<8x150xf32>
    %c0_11 = arith.constant 0 : index
    %c0_12 = arith.constant 0 : index
    %11 = vector.load %arg5[%c0_11, %c0_12] : memref<1x150xf32, #tpu.memory_space<vmem>>, vector<1x150xf32>
    %12 = vector.broadcast %11 : vector<1x150xf32> to vector<8x150xf32>
    %13 = arith.addf %10, %12 : vector<8x150xf32>
    %cst_13 = arith.constant 0.000000e+00 : f32
    %14 = vector.broadcast %cst_13 : f32 to vector<8x150xf32>
    %15 = arith.maximumf %13, %14 : vector<8x150xf32>
    %cst_14 = arith.constant 5.000000e-01 : f32
    %16 = vector.broadcast %cst_14 : f32 to vector<8x150xf32>
    %17 = arith.mulf %16, %15 : vector<8x150xf32>
    %18 = math.exp %17 : vector<8x150xf32>
    %19 = arith.mulf %1, %18 : vector<8x150xf32>
    %20 = arith.addf %19, %8 : vector<8x150xf32>
    %c0_15 = arith.constant 0 : index
    %c0_16 = arith.constant 0 : index
    %21 = vector.load %arg7[%c0_15, %c0_16] : memref<8x150xf32, #tpu.memory_space<vmem>>, vector<8x150xf32>
    tpu.vector_store %arg7[%c0_15, %c0_16], %20 {strides = array<i32>} : memref<8x150xf32, #tpu.memory_space<vmem>>, vector<8x150xf32>,
    %c0_17 = arith.constant 0 : index
    %c0_18 = arith.constant 0 : index
    %22 = vector.load %arg8[%c0_17, %c0_18] : memref<8x150xf32, #tpu.memory_space<vmem>>, vector<8x150xf32>
    tpu.vector_store %arg8[%c0_17, %c0_18], %8 {strides = array<i32>} : memref<8x150xf32, #tpu.memory_space<vmem>>, vector<8x150xf32>,
    %c0_19 = arith.constant 0 : index
    %c0_20 = arith.constant 0 : index
    %23 = vector.load %arg9[%c0_19, %c0_20] : memref<8x150xf32, #tpu.memory_space<vmem>>, vector<8x150xf32>
    tpu.vector_store %arg9[%c0_19, %c0_20], %15 {strides = array<i32>} : memref<8x150xf32, #tpu.memory_space<vmem>>, vector<8x150xf32>,
    return
  }
  func.func @transform_0(%arg0: i32) -> (i32, i32) {
    %c0_i32 = arith.constant 0 : i32
    %c0_i32_0 = arith.constant 0 : i32
    return %arg0, %c0_i32 : i32, i32
  }
  func.func @transform_1(%arg0: i32) -> (i32, i32) {
    %c0_i32 = arith.constant 0 : i32
    %c0_i32_0 = arith.constant 0 : i32
    %c0_i32_1 = arith.constant 0 : i32
    return %c0_i32, %c0_i32_0 : i32, i32
  }
  func.func @transform_2(%arg0: i32) -> (i32, i32) {
    %c0_i32 = arith.constant 0 : i32
    %c0_i32_0 = arith.constant 0 : i32
    %c0_i32_1 = arith.constant 0 : i32
    return %c0_i32, %c0_i32_0 : i32, i32
  }
  func.func @transform_3(%arg0: i32) -> (i32, i32) {
    %c0_i32 = arith.constant 0 : i32
    %c0_i32_0 = arith.constant 0 : i32
    %c0_i32_1 = arith.constant 0 : i32
    return %c0_i32, %c0_i32_0 : i32, i32
  }
  func.func @transform_4(%arg0: i32) -> (i32, i32) {
    %c0_i32 = arith.constant 0 : i32
    %c0_i32_0 = arith.constant 0 : i32
    %c0_i32_1 = arith.constant 0 : i32
    return %c0_i32, %c0_i32_0 : i32, i32
  }
  func.func @transform_5(%arg0: i32) -> (i32, i32) {
    %c0_i32 = arith.constant 0 : i32
    %c0_i32_0 = arith.constant 0 : i32
    return %arg0, %c0_i32 : i32, i32
  }
  func.func @transform_6(%arg0: i32) -> (i32, i32) {
    %c0_i32 = arith.constant 0 : i32
    %c0_i32_0 = arith.constant 0 : i32
    return %arg0, %c0_i32 : i32, i32
  }
  func.func @transform_7(%arg0: i32) -> (i32, i32) {
    %c0_i32 = arith.constant 0 : i32
    %c0_i32_0 = arith.constant 0 : i32
    return %arg0, %c0_i32 : i32, i32
  }
  func.func @transform_8(%arg0: i32) -> (i32, i32) {
    %c0_i32 = arith.constant 0 : i32
    %c0_i32_0 = arith.constant 0 : i32
    return %arg0, %c0_i32 : i32, i32
  }
}

</mosaic_0001>

<llo_original>
// kernel: tpu_custom_call.1
$region0: #{tpu_custom_call.1}
  #allocation0 [shape = 'u32[]', space=smem, size = 0x4, offset = 0x4, fixed_abs, tag = 'smem constant byte address 0x4 - core index']
  #allocation1 [shape = 'u32[144,128]{1,0:T(1,128)}', space=vmem, size = 0x12000, scoped, tag = 'internal scratch']
  %s0 = inlined_call_operand.hbm [shape: f32[16,150], index: 0, kind: input, shape index: {}]
  %s1 = inlined_call_operand.hbm [shape: f32[150,150], index: 1, kind: input, shape index: {}]
  %s2 = inlined_call_operand.hbm [shape: f32[150,150], index: 2, kind: input, shape index: {}]
  %s3 = inlined_call_operand.vmem [shape: f32[1,150], index: 3, kind: input, shape index: {}]
  %s4 = inlined_call_operand.vmem [shape: f32[1,150], index: 4, kind: input, shape index: {}]
  %s5 = inlined_call_operand.hbm [shape: f32[16,150], index: 5, kind: input, shape index: {}]
  %s6 = inlined_call_operand.hbm [shape: f32[16,150], index: 6, kind: output, shape index: {0}]
  %s7 = inlined_call_operand.hbm [shape: f32[16,150], index: 7, kind: output, shape index: {1}]
  %s8 = inlined_call_operand.hbm [shape: f32[16,150], index: 8, kind: output, shape index: {2}]
  %9 = xla_tuple %s6, %s7, %s8
  %s10 = sld [smem:[#allocation0]]
  $region89: #{tpu_custom_call.1} parent=0
    _
  %s12 = ssub.s32 1, %s10
  %s13 = scalar_select 0, %s12, %s10
  $region1: #{tpu_custom_call.1} parent=0
    #allocation2 [shape = 'u8[16384]{0}', space=vmem, size = 0x4000, scoped, tag = 'input window, operand 0']
    #allocation3 [shape = 's32[2]{0}', space=sflag, size = 0x8, scoped, tag = 'scoped memory for tpu_custom_call.1']
    #allocation4 [shape = 's32[2]{0}', space=sflag, size = 0x8, scoped, tag = 'scoped memory for tpu_custom_call.1']
    #allocation5 [shape = 'u8[155648]{0}', space=vmem, size = 0x26000, scoped, tag = 'input window, operand 1, single buffered']
    #allocation6 [shape = 's32[1]{0}', space=sflag, size = 0x4, scoped, tag = 'scoped memory for tpu_custom_call.1']
    #allocation7 [shape = 'u8[155648]{0}', space=vmem, size = 0x26000, scoped, tag = 'input window, operand 2, single buffered']
    #allocation8 [shape = 'u8[16384]{0}', space=vmem, size = 0x4000, scoped, tag = 'input window, operand 5']
    #allocation9 [shape = 's32[2]{0}', space=sflag, size = 0x8, scoped, tag = 'scoped memory for tpu_custom_call.1']
    #allocation10 [shape = 'u8[16384]{0}', space=vmem, size = 0x4000, scoped, tag = 'output window, operand 0']
    #allocation11 [shape = 'u8[16384]{0}', space=vmem, size = 0x4000, scoped, tag = 'output window, operand 1']
    #allocation12 [shape = 's32[2]{0}', space=sflag, size = 0x8, scoped, tag = 'scoped memory for tpu_custom_call.1']
    #allocation13 [shape = 'u8[16384]{0}', space=vmem, size = 0x4000, scoped, tag = 'output window, operand 2']
    %14 = vsyncpa [#allocation3], 0
    %s15 = scalar_lea.sflag [#allocation3], 1
    %16 = vsyncpa %s15, 0
    %17 = vsyncpa [#allocation6], 0
    %18 = vsyncpa [#allocation9], 0
    %s19 = scalar_lea.sflag [#allocation9], 1
    %20 = vsyncpa %s19, 0
    %21 = vsyncpa [#allocation4], 0
    %s22 = scalar_lea.sflag [#allocation4], 1
    %23 = vsyncpa %s22, 0
    %24 = vsyncpa [#allocation12], 0
    %s25 = scalar_lea.sflag [#allocation12], 1
    %26 = vsyncpa %s25, 0
    loop: start=0, step=1, limit=4
    $region2: #{tpu_custom_call.1} parent=1 // loop_pre_header
      _
    $region3: #{tpu_custom_call.1} parent=1 // loop_header
      %s28 = sphi 0, %s32
      %p29 = scmp.ge.s32.totalorder %s28, 4
      %s38 = sphi 0, %s40
      %s41 = sphi 0, %s38
      %s42 = sphi 0, %s41
      %s58 = sphi 0, %s42
      %s62 = sphi 0, %s62
      %s64 = sphi 0, %s62
      %s65 = sphi 0, %s64
      %s79 = sphi 0, %s65
      %s83 = sphi 0, %s83
      %s85 = sphi 0, %s83
      %s86 = sphi 0, %s85
      %s100 = sphi 0, %s86
      %s104 = sphi 0, %s104
      %s106 = sphi 0, %s104
      %s107 = sphi 0, %s106
      %s121 = sphi 0, %s107
      %s125 = sphi 0, %s125
      %s127 = sphi 0, %s125
      %s128 = sphi 0, %s127
      %s142 = sphi 0, %s128
      %s148 = sphi 0, %s150
      %s151 = sphi 0, %s148
      %s152 = sphi 0, %s151
      %s168 = sphi 0, %s152
      %s174 = sphi 0, %s176
      %s177 = sphi 0, %s174
      %s178 = sphi 0, %s177
      %s194 = sphi 0, %s178
      %s200 = sphi 0, %s202
      %s203 = sphi 0, %s200
      %s204 = sphi 0, %s203
      %s220 = sphi 0, %s204
      %s226 = sphi 0, %s228
      %s229 = sphi 0, %s226
      %s230 = sphi 0, %s229
      %s246 = sphi 0, %s230
    $region4: #{tpu_custom_call.1} parent=1 // loop_header_branch
      %31 = sbr.rel (%p29) target = $region8
    $region5: #{tpu_custom_call.1} parent=1 // loop_body
      %s33 = ssub.s32 %s28, 1
      %s34 = ssub.s32 %s28, 2
      %s35 = sadd.s32 %s28, 1
      %s36 = ssub.s32 %s28, %s35
      %p37 = scmp.eq.s32.totalorder %s36, 0
      %s39 = sadd.s32 %s38, 1
      %s40 = scalar_select %p37, %s38, %s39
      %p43 = pneg %p37
      %p44 = scmp.eq.s32.totalorder %s28, 1
      %p45 = por %p43, %p44
      %p46 = scmp.ne.s32.totalorder %s38, %s41
      %p47 = scmp.eq.s32.totalorder %s28, 0
      %p48 = por %p46, %p47
      %p49 = scmp.ne.s32.totalorder %s38, %s41
      %p50 = scmp.eq.s32.totalorder %s33, 1
      %p51 = por %p49, %p50
      %p52 = scmp.ne.s32.totalorder %s41, %s42
      %p53 = scmp.eq.s32.totalorder %s33, 0
      %p54 = por %p52, %p53
      %p55 = scmp.ne.s32.totalorder %s41, %s42
      %p56 = scmp.eq.s32.totalorder %s34, 1
      %p57 = por %p55, %p56
      %p59 = scmp.ne.s32.totalorder %s42, %s58
      %p60 = scmp.eq.s32.totalorder %s34, 0
      %p61 = por %p59, %p60
      %s63 = sadd.s32 %s62, 1
      %p66 = scmp.eq.s32.totalorder %s28, 1
      %p67 = scmp.ne.s32.totalorder %s62, %s64
      %p68 = scmp.eq.s32.totalorder %s28, 0
      %p69 = por %p67, %p68
      %p70 = scmp.ne.s32.totalorder %s62, %s64
      %p71 = scmp.eq.s32.totalorder %s33, 1
      %p72 = por %p70, %p71
      %p73 = scmp.ne.s32.totalorder %s64, %s65
      %p74 = scmp.eq.s32.totalorder %s33, 0
      %p75 = por %p73, %p74
      %p76 = scmp.ne.s32.totalorder %s64, %s65
      %p77 = scmp.eq.s32.totalorder %s34, 1
      %p78 = por %p76, %p77
      %p80 = scmp.ne.s32.totalorder %s65, %s79
      %p81 = scmp.eq.s32.totalorder %s34, 0
      %p82 = por %p80, %p81
      %s84 = sadd.s32 %s83, 1
      %p87 = scmp.eq.s32.totalorder %s28, 1
      %p88 = scmp.ne.s32.totalorder %s83, %s85
      %p89 = scmp.eq.s32.totalorder %s28, 0
      %p90 = por %p88, %p89
      %p91 = scmp.ne.s32.totalorder %s83, %s85
      %p92 = scmp.eq.s32.totalorder %s33, 1
      %p93 = por %p91, %p92
      %p94 = scmp.ne.s32.totalorder %s85, %s86
      %p95 = scmp.eq.s32.totalorder %s33, 0
      %p96 = por %p94, %p95
      %p97 = scmp.ne.s32.totalorder %s85, %s86
      %p98 = scmp.eq.s32.totalorder %s34, 1
      %p99 = por %p97, %p98
      %p101 = scmp.ne.s32.totalorder %s86, %s100
      %p102 = scmp.eq.s32.totalorder %s34, 0
      %p103 = por %p101, %p102
      %s105 = sadd.s32 %s104, 1
      %p108 = scmp.eq.s32.totalorder %s28, 1
      %p109 = scmp.ne.s32.totalorder %s104, %s106
      %p110 = scmp.eq.s32.totalorder %s28, 0
      %p111 = por %p109, %p110
      %p112 = scmp.ne.s32.totalorder %s104, %s106
      %p113 = scmp.eq.s32.totalorder %s33, 1
      %p114 = por %p112, %p113
      %p115 = scmp.ne.s32.totalorder %s106, %s107
      %p116 = scmp.eq.s32.totalorder %s33, 0
      %p117 = por %p115, %p116
      %p118 = scmp.ne.s32.totalorder %s106, %s107
      %p119 = scmp.eq.s32.totalorder %s34, 1
      %p120 = por %p118, %p119
      %p122 = scmp.ne.s32.totalorder %s107, %s121
      %p123 = scmp.eq.s32.totalorder %s34, 0
      %p124 = por %p122, %p123
      %s126 = sadd.s32 %s125, 1
      %p129 = scmp.eq.s32.totalorder %s28, 1
      %p130 = scmp.ne.s32.totalorder %s125, %s127
      %p131 = scmp.eq.s32.totalorder %s28, 0
      %p132 = por %p130, %p131
      %p133 = scmp.ne.s32.totalorder %s125, %s127
      %p134 = scmp.eq.s32.totalorder %s33, 1
      %p135 = por %p133, %p134
      %p136 = scmp.ne.s32.totalorder %s127, %s128
      %p137 = scmp.eq.s32.totalorder %s33, 0
      %p138 = por %p136, %p137
      %p139 = scmp.ne.s32.totalorder %s127, %s128
      %p140 = scmp.eq.s32.totalorder %s34, 1
      %p141 = por %p139, %p140
      %p143 = scmp.ne.s32.totalorder %s128, %s142
      %p144 = scmp.eq.s32.totalorder %s34, 0
      %p145 = por %p143, %p144
      %s146 = ssub.s32 %s28, %s35
      %p147 = scmp.eq.s32.totalorder %s146, 0
      %s149 = sadd.s32 %s148, 1
      %s150 = scalar_select %p147, %s148, %s149
      %p153 = pneg %p147
      %p154 = scmp.eq.s32.totalorder %s28, 1
      %p155 = por %p153, %p154
      %p156 = scmp.ne.s32.totalorder %s148, %s151
      %p157 = scmp.eq.s32.totalorder %s28, 0
      %p158 = por %p156, %p157
      %p159 = scmp.ne.s32.totalorder %s148, %s151
      %p160 = scmp.eq.s32.totalorder %s33, 1
      %p161 = por %p159, %p160
      %p162 = scmp.ne.s32.totalorder %s151, %s152
      %p163 = scmp.eq.s32.totalorder %s33, 0
      %p164 = por %p162, %p163
      %p165 = scmp.ne.s32.totalorder %s151, %s152
      %p166 = scmp.eq.s32.totalorder %s34, 1
      %p167 = por %p165, %p166
      %p169 = scmp.ne.s32.totalorder %s152, %s168
      %p170 = scmp.eq.s32.totalorder %s34, 0
      %p171 = por %p169, %p170
      %s172 = ssub.s32 %s28, %s35
      %p173 = scmp.eq.s32.totalorder %s172, 0
      %s175 = sadd.s32 %s174, 1
      %s176 = scalar_select %p173, %s174, %s175
      %p179 = pneg %p173
      %p180 = scmp.eq.s32.totalorder %s28, 1
      %p181 = por %p179, %p180
      %p182 = scmp.ne.s32.totalorder %s174, %s177
      %p183 = scmp.eq.s32.totalorder %s28, 0
      %p184 = por %p182, %p183
      %p185 = scmp.ne.s32.totalorder %s174, %s177
      %p186 = scmp.eq.s32.totalorder %s33, 1
      %p187 = por %p185, %p186
      %p188 = scmp.ne.s32.totalorder %s177, %s178
      %p189 = scmp.eq.s32.totalorder %s33, 0
      %p190 = por %p188, %p189
      %p191 = scmp.ne.s32.totalorder %s177, %s178
      %p192 = scmp.eq.s32.totalorder %s34, 1
      %p193 = por %p191, %p192
      %p195 = scmp.ne.s32.totalorder %s178, %s194
      %p196 = scmp.eq.s32.totalorder %s34, 0
      %p197 = por %p195, %p196
      %s198 = ssub.s32 %s28, %s35
      %p199 = scmp.eq.s32.totalorder %s198, 0
      %s201 = sadd.s32 %s200, 1
      %s202 = scalar_select %p199, %s200, %s201
      %p205 = pneg %p199
      %p206 = scmp.eq.s32.totalorder %s28, 1
      %p207 = por %p205, %p206
      %p208 = scmp.ne.s32.totalorder %s200, %s203
      %p209 = scmp.eq.s32.totalorder %s28, 0
      %p210 = por %p208, %p209
      %p211 = scmp.ne.s32.totalorder %s200, %s203
      %p212 = scmp.eq.s32.totalorder %s33, 1
      %p213 = por %p211, %p212
      %p214 = scmp.ne.s32.totalorder %s203, %s204
      %p215 = scmp.eq.s32.totalorder %s33, 0
      %p216 = por %p214, %p215
      %p217 = scmp.ne.s32.totalorder %s203, %s204
      %p218 = scmp.eq.s32.totalorder %s34, 1
      %p219 = por %p217, %p218
      %p221 = scmp.ne.s32.totalorder %s204, %s220
      %p222 = scmp.eq.s32.totalorder %s34, 0
      %p223 = por %p221, %p222
      %s224 = ssub.s32 %s28, %s35
      %p225 = scmp.eq.s32.totalorder %s224, 0
      %s227 = sadd.s32 %s226, 1
      %s228 = scalar_select %p225, %s226, %s227
      %p231 = pneg %p225
      %p232 = scmp.eq.s32.totalorder %s28, 1
      %p233 = por %p231, %p232
      %p234 = scmp.ne.s32.totalorder %s226, %s229
      %p235 = scmp.eq.s32.totalorder %s28, 0
      %p236 = por %p234, %p235
      %p237 = scmp.ne.s32.totalorder %s226, %s229
      %p238 = scmp.eq.s32.totalorder %s33, 1
      %p239 = por %p237, %p238
      %p240 = scmp.ne.s32.totalorder %s229, %s230
      %p241 = scmp.eq.s32.totalorder %s33, 0
      %p242 = por %p240, %p241
      %p243 = scmp.ne.s32.totalorder %s229, %s230
      %p244 = scmp.eq.s32.totalorder %s34, 1
      %p245 = por %p243, %p244
      %p247 = scmp.ne.s32.totalorder %s230, %s246
      %p248 = scmp.eq.s32.totalorder %s34, 0
      %p249 = por %p247, %p248
      %p250 = scmp.le.s32.totalorder 1, %s28
      %p251 = scmp.lt.s32.totalorder %s28, 3
      %p252 = pnand %p250, %p251
      %p253 = pneg %p252
      // Predicated region
      $region9: #{tpu_custom_call.1} parent=5 // pred_check
        _
      $region10: #{tpu_custom_call.1} parent=5 // pred_check_branch
        %255 = sbr.rel (%p252) target = $region12
      $region11: #{tpu_custom_call.1} parent=5 // pred_region
        %s256 = ssub.s32 %s28, 1
        // Predicated region
        $region13: #{tpu_custom_call.1} parent=11 // pred_check
          %p257 = pneg %p75
        $region14: #{tpu_custom_call.1} parent=11 // pred_check_branch
          %259 = sbr.rel (%p257) target = $region16
        $region15: #{tpu_custom_call.1} parent=11 // pred_region
          %s261 = ssub.s32 4864, 4864
          %262 = vsyncadd [#allocation6], %s261
          %s263 = sshll.u32 [#allocation5], 4
          %s264 = int_to_ptr.vmem [resolvable:$true] %s263
          %269 = dma.hbm_to_vmem [thread:$0]  %s1, 4864, %s264, [#allocation6], 256, 256, 16
        $region16: #{tpu_custom_call.1} parent=11 // pred_fallthru
          _
        // Predicated region
        $region17: #{tpu_custom_call.1} parent=11 // pred_check
          %p270 = pneg %p96
        $region18: #{tpu_custom_call.1} parent=11 // pred_check_branch
          %272 = sbr.rel (%p270) target = $region20
        $region19: #{tpu_custom_call.1} parent=11 // pred_region
          %s274 = ssub.s32 4864, 4864
          %275 = vsyncadd [#allocation6], %s274
          %s276 = sshll.u32 [#allocation7], 4
          %s277 = int_to_ptr.vmem [resolvable:$true] %s276
          %282 = dma.hbm_to_vmem [thread:$0]  %s2, 4864, %s277, [#allocation6], 256, 256, 16
        $region20: #{tpu_custom_call.1} parent=11 // pred_fallthru
          _
        // Predicated region
        $region21: #{tpu_custom_call.1} parent=11 // pred_check
          %p283 = pneg %p117
        $region22: #{tpu_custom_call.1} parent=11 // pred_check_branch
          %285 = sbr.rel (%p283) target = $region24
        $region23: #{tpu_custom_call.1} parent=11 // pred_region
          _
        $region24: #{tpu_custom_call.1} parent=11 // pred_fallthru
          _
        // Predicated region
        $region25: #{tpu_custom_call.1} parent=11 // pred_check
          %p286 = pneg %p138
        $region26: #{tpu_custom_call.1} parent=11 // pred_check_branch
          %288 = sbr.rel (%p286) target = $region28
        $region27: #{tpu_custom_call.1} parent=11 // pred_region
          _
        $region28: #{tpu_custom_call.1} parent=11 // pred_fallthru
          _
      $region12: #{tpu_custom_call.1} parent=5 // pred_fallthru
        _
      %p289 = scmp.lt.s32.totalorder %s28, 2
      // Predicated region
      $region29: #{tpu_custom_call.1} parent=5 // pred_check
        %p290 = pneg %p289
      $region30: #{tpu_custom_call.1} parent=5 // pred_check_branch
        %292 = sbr.rel (%p290) target = $region32
      $region31: #{tpu_custom_call.1} parent=5 // pred_region
        // Predicated region
        $region33: #{tpu_custom_call.1} parent=31 // pred_check
          %p293 = pneg %p48
        $region34: #{tpu_custom_call.1} parent=31 // pred_check_branch
          %295 = sbr.rel (%p293) target = $region36
        $region35: #{tpu_custom_call.1} parent=31 // pred_region
          %s296 = sand.u32 %s38, 1
          %s297 = scalar_lea.sflag [#allocation3], %s296
          %s298 = sand.u32 %s38, 1
          %s299 = smul.addr %s298, 16
          %s300 = scalar_lea.vmem [#allocation2], %s299
          %s302 = ssub.s32 256, 256
          %303 = vsyncadd %s297, %s302
          %s304 = smul.addr %s28, 2
          %s305 = smul.addr %s304, 128
          %s306 = scalar_lea.hbm %s0, %s305
          %s308 = sshll.u32 %s300, 4
          %s309 = int_to_ptr.vmem [resolvable:$true] %s308
          %311 = dma.hbm_to_vmem [thread:$0]  %s306, 256, %s309, %s297
        $region36: #{tpu_custom_call.1} parent=31 // pred_fallthru
          _
        // Predicated region
        $region37: #{tpu_custom_call.1} parent=31 // pred_check
          %p312 = pneg %p158
        $region38: #{tpu_custom_call.1} parent=31 // pred_check_branch
          %314 = sbr.rel (%p312) target = $region40
        $region39: #{tpu_custom_call.1} parent=31 // pred_region
          %s315 = sand.u32 %s148, 1
          %s316 = scalar_lea.sflag [#allocation9], %s315
          %s317 = sand.u32 %s148, 1
          %s318 = smul.addr %s317, 16
          %s319 = scalar_lea.vmem [#allocation8], %s318
          %s321 = ssub.s32 256, 256
          %322 = vsyncadd %s316, %s321
          %s323 = smul.addr %s28, 2
          %s324 = smul.addr %s323, 128
          %s325 = scalar_lea.hbm %s5, %s324
          %s327 = sshll.u32 %s319, 4
          %s328 = int_to_ptr.vmem [resolvable:$true] %s327
          %330 = dma.hbm_to_vmem [thread:$0]  %s325, 256, %s328, %s316
        $region40: #{tpu_custom_call.1} parent=31 // pred_fallthru
          _
      $region32: #{tpu_custom_call.1} parent=5 // pred_fallthru
        _
      %p331 = scmp.le.s32.totalorder 1, %s28
      %p332 = scmp.lt.s32.totalorder %s28, 3
      %p333 = pnand %p331, %p332
      %p334 = pneg %p333
      // Predicated region
      $region41: #{tpu_custom_call.1} parent=5 // pred_check
        _
      $region42: #{tpu_custom_call.1} parent=5 // pred_check_branch
        %336 = sbr.rel (%p333) target = $region44
      $region43: #{tpu_custom_call.1} parent=5 // pred_region
        %s337 = ssub.s32 %s28, 1
        %s338 = sand.u32 %s41, 1
        %s339 = scalar_lea.sflag [#allocation3], %s338
        %s340 = sand.u32 %s41, 1
        %s341 = smul.addr %s340, 16
        %s342 = scalar_lea.vmem [#allocation2], %s341
        // Predicated region
        $region45: #{tpu_custom_call.1} parent=43 // pred_check
          %p343 = pneg %p54
        $region46: #{tpu_custom_call.1} parent=43 // pred_check_branch
          %345 = sbr.rel (%p343) target = $region48
        $region47: #{tpu_custom_call.1} parent=43 // pred_region
          %346 = dma.done %s339, 256
        $region48: #{tpu_custom_call.1} parent=43 // pred_fallthru
          _
        // Predicated region
        $region49: #{tpu_custom_call.1} parent=43 // pred_check
          %p347 = pneg %p75
        $region50: #{tpu_custom_call.1} parent=43 // pred_check_branch
          %349 = sbr.rel (%p347) target = $region52
        $region51: #{tpu_custom_call.1} parent=43 // pred_region
          %350 = dma.done [#allocation6], 4864
        $region52: #{tpu_custom_call.1} parent=43 // pred_fallthru
          _
        // Predicated region
        $region53: #{tpu_custom_call.1} parent=43 // pred_check
          %p351 = pneg %p96
        $region54: #{tpu_custom_call.1} parent=43 // pred_check_branch
          %353 = sbr.rel (%p351) target = $region56
        $region55: #{tpu_custom_call.1} parent=43 // pred_region
          %354 = dma.done [#allocation6], 4864
        $region56: #{tpu_custom_call.1} parent=43 // pred_fallthru
          _
        %s355 = sand.u32 %s151, 1
        %s356 = scalar_lea.sflag [#allocation9], %s355
        %s357 = sand.u32 %s151, 1
        %s358 = smul.addr %s357, 16
        %s359 = scalar_lea.vmem [#allocation8], %s358
        // Predicated region
        $region57: #{tpu_custom_call.1} parent=43 // pred_check
          %p360 = pneg %p164
        $region58: #{tpu_custom_call.1} parent=43 // pred_check_branch
          %362 = sbr.rel (%p360) target = $region60
        $region59: #{tpu_custom_call.1} parent=43 // pred_region
          %363 = dma.done %s356, 256
        $region60: #{tpu_custom_call.1} parent=43 // pred_fallthru
          _
        %s364 = sand.u32 %s41, 1
        %s365 = scalar_lea.sflag [#allocation3], %s364
        %s366 = sand.u32 %s41, 1
        %s367 = smul.addr %s366, 16
        %s368 = scalar_lea.vmem [#allocation2], %s367
        %p369 = pneg %p54
        %p370 = pneg %p51
        %p371 = pneg %p75
        %p372 = pneg %p72
        %p373 = pneg %p96
        %p374 = pneg %p93
        %p375 = pneg %p117
        %p376 = pneg %p114
        %p377 = pneg %p138
        %p378 = pneg %p135
        %s379 = sand.u32 %s151, 1
        %s380 = scalar_lea.sflag [#allocation9], %s379
        %s381 = sand.u32 %s151, 1
        %s382 = smul.addr %s381, 16
        %s383 = scalar_lea.vmem [#allocation8], %s382
        %p384 = pneg %p164
        %p385 = pneg %p161
        %p386 = pneg %p190
        %p387 = pneg %p187
        %s388 = sand.u32 %s177, 1
        %s389 = scalar_lea.sflag [#allocation4], %s388
        %s390 = sand.u32 %s177, 1
        %s391 = smul.addr %s390, 16
        %s392 = scalar_lea.vmem [#allocation10], %s391
        %p393 = pneg %p216
        %p394 = pneg %p213
        %s395 = sand.u32 %s33, 1
        %s396 = scalar_lea.sflag [#allocation12], %s395
        %s397 = sand.u32 %s203, 1
        %s398 = smul.addr %s397, 16
        %s399 = scalar_lea.vmem [#allocation11], %s398
        %p400 = pneg %p242
        %p401 = pneg %p239
        %s402 = sand.u32 %s33, 1
        %s403 = scalar_lea.sflag [#allocation12], %s402
        %s404 = sand.u32 %s229, 1
        %s405 = smul.addr %s404, 16
        %s406 = scalar_lea.vmem [#allocation13], %s405
        %v407 = vld [vmem:[%s342] sm:$0xff]
        %v408 = vld [vmem:[%s342 + $0x8] sm:$0xff]
        %v409 = vld [vmem:[%s359] sm:$0xff]
        %v410 = vld [vmem:[%s359 + $0x8] sm:$0xff]
        %v411 = vld [vmem:[#allocation5] sm:$0xff]
        %v412 = vld [vmem:[#allocation5 + $0x8] sm:$0xff]
        %v413 = vld [vmem:[#allocation5 + $0x10] sm:$0xff]
        %v414 = vld [vmem:[#allocation5 + $0x18] sm:$0xff]
        %v415 = vld [vmem:[#allocation5 + $0x20] sm:$0xff]
        %v416 = vld [vmem:[#allocation5 + $0x28] sm:$0xff]
        %v417 = vld [vmem:[#allocation5 + $0x30] sm:$0xff]
        %v418 = vld [vmem:[#allocation5 + $0x38] sm:$0xff]
        %v419 = vld [vmem:[#allocation5 + $0x40] sm:$0xff]
        %v420 = vld [vmem:[#allocation5 + $0x48] sm:$0xff]
        %v421 = vld [vmem:[#allocation5 + $0x50] sm:$0xff]
        %v422 = vld [vmem:[#allocation5 + $0x58] sm:$0xff]
        %v423 = vld [vmem:[#allocation5 + $0x60] sm:$0xff]
        %v424 = vld [vmem:[#allocation5 + $0x68] sm:$0xff]
        %v425 = vld [vmem:[#allocation5 + $0x70] sm:$0xff]
        %v426 = vld [vmem:[#allocation5 + $0x78] sm:$0xff]
        %v427 = vld [vmem:[#allocation5 + $0x80] sm:$0xff]
        %v428 = vld [vmem:[#allocation5 + $0x88] sm:$0xff]
        %v429 = vld [vmem:[#allocation5 + $0x90] sm:$0xff]
        %v430 = vld [vmem:[#allocation5 + $0x98] sm:$0xff]
        %v431 = vld [vmem:[#allocation5 + $0xa0] sm:$0xff]
        %v432 = vld [vmem:[#allocation5 + $0xa8] sm:$0xff]
        %v433 = vld [vmem:[#allocation5 + $0xb0] sm:$0xff]
        %v434 = vld [vmem:[#allocation5 + $0xb8] sm:$0xff]
        %v435 = vld [vmem:[#allocation5 + $0xc0] sm:$0xff]
        %v436 = vld [vmem:[#allocation5 + $0xc8] sm:$0xff]
        %v437 = vld [vmem:[#allocation5 + $0xd0] sm:$0xff]
        %v438 = vld [vmem:[#allocation5 + $0xd8] sm:$0xff]
        %v439 = vld [vmem:[#allocation5 + $0xe0] sm:$0xff]
        %v440 = vld [vmem:[#allocation5 + $0xe8] sm:$0xff]
        %v441 = vld [vmem:[#allocation5 + $0xf0] sm:$0xff]
        %v442 = vld [vmem:[#allocation5 + $0xf8] sm:$0xff]
        %v443 = vld [vmem:[#allocation5 + $0x100] sm:$0xff]
        %v444 = vld [vmem:[#allocation5 + $0x108] sm:$0xff]
        %v445 = vld [vmem:[#allocation5 + $0x110] sm:$0xff]
        %v446 = vld [vmem:[#allocation5 + $0x118] sm:$0xff]
        %v447 = vld [vmem:[#allocation5 + $0x120] sm:$0x3f]
        %v448 = vld [vmem:[#allocation5 + $0x128] sm:$0x3f]
        %v449 = vld [vmem:[%s3] sm:$0x3]
        %v451 = vlaneseq
        %v452 = vshrl.u32 %v451, 7
        %v453 = vsub.s32 0, %v452
        %v454 = vrot.slane %v449, %v453
        %v455 = vlaneseq
        %v456 = vshrl.u32 %v455, 7
        %v457 = vsub.s32 1, %v456
        %v458 = vrot.slane %v449, %v457
        %vm461 = vcmask 179200
        %v463 = vsel %vm461, %v408, 0
        %vm465 = vcmask 1045504
        %v467 = vsel %vm465, %v447, 0
        %v470 = vsel %vm465, %v448, 0
        %472 = vmatprep.subr.mxu0 %v442
        %473 = vmatpush1.msra.mxu0 %v441
        %474 = vmatprep.subr.mxu0 %v440
        %475 = vmatpush1.msra.mxu0 %v439
        %476 = vmatprep.subr.mxu0 %v438
        %477 = vmatpush1.msra.mxu0 %v437
        %478 = vmatprep.subr.mxu0 %v436
        %479 = vmatpush1.msra.mxu0 %v435
        %480 = vmatprep.subr.mxu0 %v434
        %481 = vmatpush1.msra.mxu0 %v433
        %482 = vmatprep.subr.mxu0 %v432
        %483 = vmatpush1.msra.mxu0 %v431
        %484 = vmatprep.subr.mxu0 %v430
        %485 = vmatpush1.msra.mxu0 %v429
        %486 = vmatprep.subr.mxu0 %v428
        %487 = vmatpush1.msra.mxu0 %v427
        %488 = vmatprep.subr.mxu0 %v426
        %489 = vmatpush1.msra.mxu0 %v425
        %490 = vmatprep.subr.mxu0 %v424
        %491 = vmatpush1.msra.mxu0 %v423
        %492 = vmatprep.subr.mxu0 %v422
        %493 = vmatpush1.msra.mxu0 %v421
        %494 = vmatprep.subr.mxu0 %v420
        %495 = vmatpush1.msra.mxu0 %v419
        %496 = vmatprep.subr.mxu0 %v418
        %497 = vmatpush1.msra.mxu0 %v417
        %498 = vmatprep.subr.mxu0 %v416
        %499 = vmatpush1.msra.mxu0 %v415
        %500 = vmatprep.subr.mxu0 %v414
        %501 = vmatpush1.msra.mxu0 %v413
        %502 = vmatprep.subr.mxu0 %v412
        %503 = vmatpush1.msra.mxu0 %v411
        %504 = vmatprep.subr.mxu0 0.0
        %505 = vmatpush2.msra.mxu0 0.0
        %506 = vmatprep.subr.mxu0 0.0
        %507 = vmatpush2.msra.mxu0 0.0
        %508 = vmatprep.subr.mxu0 0.0
        %509 = vmatpush2.msra.mxu0 0.0
        %510 = vmatprep.subr.mxu0 0.0
        %511 = vmatpush2.msra.mxu0 0.0
        %512 = vmatprep.subr.mxu0 0.0
        %513 = vmatpush2.msra.mxu0 0.0
        %514 = vmatprep.subr.mxu0 0.0
        %515 = vmatpush2.msra.mxu0 0.0
        %516 = vmatprep.subr.mxu0 0.0
        %517 = vmatpush2.msra.mxu0 0.0
        %518 = vmatprep.subr.mxu0 0.0
        %519 = vmatpush2.msra.mxu0 0.0
        %520 = vmatprep.subr.mxu0 0.0
        %521 = vmatpush2.msra.mxu0 0.0
        %522 = vmatprep.subr.mxu0 0.0
        %523 = vmatpush2.msra.mxu0 0.0
        %524 = vmatprep.subr.mxu0 0.0
        %525 = vmatpush2.msra.mxu0 0.0
        %526 = vmatprep.subr.mxu0 0.0
        %527 = vmatpush2.msra.mxu0 0.0
        %528 = vmatprep.subr.mxu0 0.0
        %529 = vmatpush2.msra.mxu0 0.0
        %530 = vmatprep.subr.mxu0 %v470
        %531 = vmatpush2.msra.mxu0 %v467
        %532 = vmatprep.subr.mxu0 %v446
        %533 = vmatpush2.msra.mxu0 %v445
        %534 = vmatprep.subr.mxu0 %v444
        %535 = vmatpush2.msra.mxu0 %v443
        %536 = vmatprep.mubr.f32.mxu0 %v463
        %537 = vmatmul.mubr.f32.gmra.mxu0 %v407
        %v538 = vpop.f32.mrf.mxu0
        %v539 = vadd.f32 %v454, %v538
        %v540 = vpop.f32.mrf.mxu0
        %v541 = vadd.f32 %v458, %v540
        %542 = vdwg.mxu0
        %v543 = vmax.f32 %v539, 0.0
        %v544 = vmax.f32 %v541, 0.0
        %v545 = vld [vmem:[#allocation7] sm:$0xff]
        %v546 = vld [vmem:[#allocation7 + $0x8] sm:$0xff]
        %v547 = vld [vmem:[#allocation7 + $0x10] sm:$0xff]
        %v548 = vld [vmem:[#allocation7 + $0x18] sm:$0xff]
        %v549 = vld [vmem:[#allocation7 + $0x20] sm:$0xff]
        %v550 = vld [vmem:[#allocation7 + $0x28] sm:$0xff]
        %v551 = vld [vmem:[#allocation7 + $0x30] sm:$0xff]
        %v552 = vld [vmem:[#allocation7 + $0x38] sm:$0xff]
        %v553 = vld [vmem:[#allocation7 + $0x40] sm:$0xff]
        %v554 = vld [vmem:[#allocation7 + $0x48] sm:$0xff]
        %v555 = vld [vmem:[#allocation7 + $0x50] sm:$0xff]
        %v556 = vld [vmem:[#allocation7 + $0x58] sm:$0xff]
        %v557 = vld [vmem:[#allocation7 + $0x60] sm:$0xff]
        %v558 = vld [vmem:[#allocation7 + $0x68] sm:$0xff]
        %v559 = vld [vmem:[#allocation7 + $0x70] sm:$0xff]
        %v560 = vld [vmem:[#allocation7 + $0x78] sm:$0xff]
        %v561 = vld [vmem:[#allocation7 + $0x80] sm:$0xff]
        %v562 = vld [vmem:[#allocation7 + $0x88] sm:$0xff]
        %v563 = vld [vmem:[#allocation7 + $0x90] sm:$0xff]
        %v564 = vld [vmem:[#allocation7 + $0x98] sm:$0xff]
        %v565 = vld [vmem:[#allocation7 + $0xa0] sm:$0xff]
        %v566 = vld [vmem:[#allocation7 + $0xa8] sm:$0xff]
        %v567 = vld [vmem:[#allocation7 + $0xb0] sm:$0xff]
        %v568 = vld [vmem:[#allocation7 + $0xb8] sm:$0xff]
        %v569 = vld [vmem:[#allocation7 + $0xc0] sm:$0xff]
        %v570 = vld [vmem:[#allocation7 + $0xc8] sm:$0xff]
        %v571 = vld [vmem:[#allocation7 + $0xd0] sm:$0xff]
        %v572 = vld [vmem:[#allocation7 + $0xd8] sm:$0xff]
        %v573 = vld [vmem:[#allocation7 + $0xe0] sm:$0xff]
        %v574 = vld [vmem:[#allocation7 + $0xe8] sm:$0xff]
        %v575 = vld [vmem:[#allocation7 + $0xf0] sm:$0xff]
        %v576 = vld [vmem:[#allocation7 + $0xf8] sm:$0xff]
        %v577 = vld [vmem:[#allocation7 + $0x100] sm:$0xff]
        %v578 = vld [vmem:[#allocation7 + $0x108] sm:$0xff]
        %v579 = vld [vmem:[#allocation7 + $0x110] sm:$0xff]
        %v580 = vld [vmem:[#allocation7 + $0x118] sm:$0xff]
        %v581 = vld [vmem:[#allocation7 + $0x120] sm:$0x3f]
        %v582 = vld [vmem:[#allocation7 + $0x128] sm:$0x3f]
        %v583 = vld [vmem:[%s4] sm:$0x3]
        %v585 = vlaneseq
        %v586 = vshrl.u32 %v585, 7
        %v587 = vsub.s32 0, %v586
        %v588 = vrot.slane %v583, %v587
        %v589 = vlaneseq
        %v590 = vshrl.u32 %v589, 7
        %v591 = vsub.s32 1, %v590
        %v592 = vrot.slane %v583, %v591
        %v596 = vsel %vm465, %v581, 0
        %v599 = vsel %vm465, %v582, 0
        %601 = vmatprep.subr.mxu0 %v576
        %602 = vmatpush1.msra.mxu0 %v575
        %603 = vmatprep.subr.mxu0 %v574
        %604 = vmatpush1.msra.mxu0 %v573
        %605 = vmatprep.subr.mxu0 %v572
        %606 = vmatpush1.msra.mxu0 %v571
        %607 = vmatprep.subr.mxu0 %v570
        %608 = vmatpush1.msra.mxu0 %v569
        %609 = vmatprep.subr.mxu0 %v568
        %610 = vmatpush1.msra.mxu0 %v567
        %611 = vmatprep.subr.mxu0 %v566
        %612 = vmatpush1.msra.mxu0 %v565
        %613 = vmatprep.subr.mxu0 %v564
        %614 = vmatpush1.msra.mxu0 %v563
        %615 = vmatprep.subr.mxu0 %v562
        %616 = vmatpush1.msra.mxu0 %v561
        %617 = vmatprep.subr.mxu0 %v560
        %618 = vmatpush1.msra.mxu0 %v559
        %619 = vmatprep.subr.mxu0 %v558
        %620 = vmatpush1.msra.mxu0 %v557
        %621 = vmatprep.subr.mxu0 %v556
        %622 = vmatpush1.msra.mxu0 %v555
        %623 = vmatprep.subr.mxu0 %v554
        %624 = vmatpush1.msra.mxu0 %v553
        %625 = vmatprep.subr.mxu0 %v552
        %626 = vmatpush1.msra.mxu0 %v551
        %627 = vmatprep.subr.mxu0 %v550
        %628 = vmatpush1.msra.mxu0 %v549
        %629 = vmatprep.subr.mxu0 %v548
        %630 = vmatpush1.msra.mxu0 %v547
        %631 = vmatprep.subr.mxu0 %v546
        %632 = vmatpush1.msra.mxu0 %v545
        %633 = vmatprep.subr.mxu0 0.0
        %634 = vmatpush2.msra.mxu0 0.0
        %635 = vmatprep.subr.mxu0 0.0
        %636 = vmatpush2.msra.mxu0 0.0
        %637 = vmatprep.subr.mxu0 0.0
        %638 = vmatpush2.msra.mxu0 0.0
        %639 = vmatprep.subr.mxu0 0.0
        %640 = vmatpush2.msra.mxu0 0.0
        %641 = vmatprep.subr.mxu0 0.0
        %642 = vmatpush2.msra.mxu0 0.0
        %643 = vmatprep.subr.mxu0 0.0
        %644 = vmatpush2.msra.mxu0 0.0
        %645 = vmatprep.subr.mxu0 0.0
        %646 = vmatpush2.msra.mxu0 0.0
        %647 = vmatprep.subr.mxu0 0.0
        %648 = vmatpush2.msra.mxu0 0.0
        %649 = vmatprep.subr.mxu0 0.0
        %650 = vmatpush2.msra.mxu0 0.0
        %651 = vmatprep.subr.mxu0 0.0
        %652 = vmatpush2.msra.mxu0 0.0
        %653 = vmatprep.subr.mxu0 0.0
        %654 = vmatpush2.msra.mxu0 0.0
        %655 = vmatprep.subr.mxu0 0.0
        %656 = vmatpush2.msra.mxu0 0.0
        %657 = vmatprep.subr.mxu0 0.0
        %658 = vmatpush2.msra.mxu0 0.0
        %659 = vmatprep.subr.mxu0 %v599
        %660 = vmatpush2.msra.mxu0 %v596
        %661 = vmatprep.subr.mxu0 %v580
        %662 = vmatpush2.msra.mxu0 %v579
        %663 = vmatprep.subr.mxu0 %v578
        %664 = vmatpush2.msra.mxu0 %v577
        %665 = vmatprep.mubr.f32.mxu0 %v463
        %666 = vmatmul.mubr.f32.gmra.mxu0 %v407
        %v667 = vpop.f32.mrf.mxu0
        %v668 = vadd.f32 %v588, %v667
        %v669 = vpop.f32.mrf.mxu0
        %v670 = vadd.f32 %v592, %v669
        %671 = vdwg.mxu0
        %v672 = vmax.f32 %v668, 0.0
        %v673 = vmax.f32 %v670, 0.0
        %v674 = vmul.f32 %v672, 0.5
        %v675 = vmul.f32 %v673, 0.5
        %v676 = vmul.f32 %v674, 1.442695
        %v677 = vpow.pop %v676
        %v678 = vmul.f32 %v675, 1.442695
        %v679 = vpow.pop %v678
        %v680 = vmul.f32 %v409, %v677
        %v681 = vmul.f32 %v410, %v679
        %v682 = vadd.f32 %v680, %v543
        %v683 = vadd.f32 %v681, %v544
        %684 = vst [vmem:[%s392] sm:$0xff] %v682
        %685 = vst.msk [vmem:[%s392 + $0x8] sm:$0xff] %vm461, %v683
        %686 = vst [vmem:[%s399] sm:$0xff] %v543
        %687 = vst.msk [vmem:[%s399 + $0x8] sm:$0xff] %vm461, %v544
        %688 = vst [vmem:[%s406] sm:$0xff] %v672
        %689 = vst.msk [vmem:[%s406 + $0x8] sm:$0xff] %vm461, %v673
        %s690 = sand.u32 %s177, 1
        %s691 = scalar_lea.sflag [#allocation4], %s690
        %s692 = sand.u32 %s177, 1
        %s693 = smul.addr %s692, 16
        %s694 = scalar_lea.vmem [#allocation10], %s693
        %s695 = sand.u32 %s33, 1
        %s696 = scalar_lea.sflag [#allocation12], %s695
        %s697 = sand.u32 %s203, 1
        %s698 = smul.addr %s697, 16
        %s699 = scalar_lea.vmem [#allocation11], %s698
        %s700 = sand.u32 %s33, 1
        %s701 = scalar_lea.sflag [#allocation12], %s700
        %s702 = sand.u32 %s229, 1
        %s703 = smul.addr %s702, 16
        %s704 = scalar_lea.vmem [#allocation13], %s703
        // Predicated region
        $region61: #{tpu_custom_call.1} parent=43 // pred_check
          %p705 = pneg %p187
        $region62: #{tpu_custom_call.1} parent=43 // pred_check_branch
          %707 = sbr.rel (%p705) target = $region64
        $region63: #{tpu_custom_call.1} parent=43 // pred_region
          %s709 = ssub.s32 256, 256
          %710 = vsyncadd %s691, %s709
          %s711 = smul.addr %s33, 2
          %s712 = smul.addr %s711, 128
          %s713 = scalar_lea.hbm %s6, %s712
          %s715 = sshll.u32 %s694, 4
          %s716 = int_to_ptr.vmem [resolvable:$true] %s715
          %718 = dma.vmem_to_hbm [thread:$0]  %s716, 256, %s713, %s691
        $region64: #{tpu_custom_call.1} parent=43 // pred_fallthru
          _
        // Predicated region
        $region65: #{tpu_custom_call.1} parent=43 // pred_check
          %p719 = pneg %p213
        $region66: #{tpu_custom_call.1} parent=43 // pred_check_branch
          %721 = sbr.rel (%p719) target = $region68
        $region67: #{tpu_custom_call.1} parent=43 // pred_region
          %s723 = ssub.s32 256, 256
          %724 = vsyncadd %s696, %s723
          %s725 = smul.addr %s33, 2
          %s726 = smul.addr %s725, 128
          %s727 = scalar_lea.hbm %s7, %s726
          %s729 = sshll.u32 %s699, 4
          %s730 = int_to_ptr.vmem [resolvable:$true] %s729
          %732 = dma.vmem_to_hbm [thread:$0]  %s730, 256, %s727, %s696
        $region68: #{tpu_custom_call.1} parent=43 // pred_fallthru
          _
        // Predicated region
        $region69: #{tpu_custom_call.1} parent=43 // pred_check
          %p733 = pneg %p239
        $region70: #{tpu_custom_call.1} parent=43 // pred_check_branch
          %735 = sbr.rel (%p733) target = $region72
        $region71: #{tpu_custom_call.1} parent=43 // pred_region
          %s737 = ssub.s32 256, 256
          %738 = vsyncadd %s701, %s737
          %s739 = smul.addr %s33, 2
          %s740 = smul.addr %s739, 128
          %s741 = scalar_lea.hbm %s8, %s740
          %s743 = sshll.u32 %s704, 4
          %s744 = int_to_ptr.vmem [resolvable:$true] %s743
          %746 = dma.vmem_to_hbm [thread:$0]  %s744, 256, %s741, %s701
        $region72: #{tpu_custom_call.1} parent=43 // pred_fallthru
          _
      $region44: #{tpu_custom_call.1} parent=5 // pred_fallthru
        _
      %p747 = scmp.le.s32.totalorder 2, %s28
      // Predicated region
      $region73: #{tpu_custom_call.1} parent=5 // pred_check
        %p748 = pneg %p747
      $region74: #{tpu_custom_call.1} parent=5 // pred_check_branch
        %750 = sbr.rel (%p748) target = $region76
      $region75: #{tpu_custom_call.1} parent=5 // pred_region
        %s751 = ssub.s32 %s28, 2
        // Predicated region
        $region77: #{tpu_custom_call.1} parent=75 // pred_check
          %p752 = pneg %p193
        $region78: #{tpu_custom_call.1} parent=75 // pred_check_branch
          %754 = sbr.rel (%p752) target = $region80
        $region79: #{tpu_custom_call.1} parent=75 // pred_region
          %s755 = sand.u32 %s178, 1
          %s756 = scalar_lea.sflag [#allocation4], %s755
          %s757 = sand.u32 %s178, 1
          %s758 = smul.addr %s757, 16
          %s759 = scalar_lea.vmem [#allocation10], %s758
          %760 = dma.done %s756, 256
        $region80: #{tpu_custom_call.1} parent=75 // pred_fallthru
          _
        // Predicated region
        $region81: #{tpu_custom_call.1} parent=75 // pred_check
          %p761 = pneg %p219
        $region82: #{tpu_custom_call.1} parent=75 // pred_check_branch
          %763 = sbr.rel (%p761) target = $region84
        $region83: #{tpu_custom_call.1} parent=75 // pred_region
          %s764 = sand.u32 %s34, 1
          %s765 = scalar_lea.sflag [#allocation12], %s764
          %s766 = sand.u32 %s204, 1
          %s767 = smul.addr %s766, 16
          %s768 = scalar_lea.vmem [#allocation11], %s767
          %769 = dma.done %s765, 256
        $region84: #{tpu_custom_call.1} parent=75 // pred_fallthru
          _
        // Predicated region
        $region85: #{tpu_custom_call.1} parent=75 // pred_check
          %p770 = pneg %p245
        $region86: #{tpu_custom_call.1} parent=75 // pred_check_branch
          %772 = sbr.rel (%p770) target = $region88
        $region87: #{tpu_custom_call.1} parent=75 // pred_region
          %s773 = sand.u32 %s34, 1
          %s774 = scalar_lea.sflag [#allocation12], %s773
          %s775 = sand.u32 %s230, 1
          %s776 = smul.addr %s775, 16
          %s777 = scalar_lea.vmem [#allocation13], %s776
          %778 = dma.done %s774, 256
        $region88: #{tpu_custom_call.1} parent=75 // pred_fallthru
          _
      $region76: #{tpu_custom_call.1} parent=5 // pred_fallthru
        _
    $region6: #{tpu_custom_call.1} parent=1 // loop_footer
      %s32 = sadd.s32 1, %s28
    $region7: #{tpu_custom_call.1} parent=1 // loop_footer_branch
      %27 = sbr.rel target = $region3
    $region8: #{tpu_custom_call.1} parent=1 // loop_exit
      _
    %779 = vsyncpa [#allocation3], 1
    %s780 = scalar_lea.sflag [#allocation3], 1
    %781 = vsyncpa %s780, 1
    %782 = vsyncpa [#allocation6], 1
    %783 = vsyncpa [#allocation9], 1
    %s784 = scalar_lea.sflag [#allocation9], 1
    %785 = vsyncpa %s784, 1
    %786 = vsyncpa [#allocation4], 1
    %s787 = scalar_lea.sflag [#allocation4], 1
    %788 = vsyncpa %s787, 1
    %789 = vsyncpa [#allocation12], 1
    %s790 = scalar_lea.sflag [#allocation12], 1
    %791 = vsyncpa %s790, 1

</llo_original>
